<compile_context>
chip_gen: v7x
topology: tpu7x:2x2x1
jax: 0.10.0
libtpu: 0.0.40
codegen_flags: <defaults>
</compile_context>

<pallas_src>
import functools
import math

import jax
import jax.numpy as jnp
from jax.experimental import pallas as pl
from jax.experimental.pallas import tpu as pltpu


def _fourier_pe_kernel(x_ref, w_ref, b_ref, o_ref):
    # x_ref: (block, fold*input_dim)   w_ref: (fold*input_dim, fold*num_atoms)
    # b_ref: (1, fold*num_atoms)       o_ref: (block, fold*num_atoms)
    x = x_ref[...].astype(jnp.float32)          # cast in-kernel (no wrapper HBM pass)
    z = jnp.dot(x, w_ref[...], preferred_element_type=jnp.float32)
    o_ref[...] = jnp.sin(z + b_ref[...]).astype(o_ref.dtype)


def _round_up(a: int, b: int) -> int:
    return -(-a // b) * b


def _tpu_config():
    """Per-generation VMEM budget / limit, fold cap, and TC count (trace-time)."""
    kind = ""
    try:
        kind = jax.devices()[0].device_kind.lower()
    except Exception:
        pass
    if "v7" in kind:
        # 64 MiB VMEM per TC, 2 TCs per chip.
        return dict(vmem_budget=26 << 20, vmem_limit=40 << 20, fold_cap=48, cores=2)
    if "v6" in kind:
        return dict(vmem_budget=44 << 20, vmem_limit=64 << 20, fold_cap=48, cores=1)
    if "v5e" in kind or "lite" in kind:
        # Scoped default is 16 MiB; raise it.  Weak f32 MXU -> cap fold at 16.
        return dict(vmem_budget=44 << 20, vmem_limit=64 << 20, fold_cap=16, cores=1)
    # Unknown generation: conservative defaults that fit any chip.
    return dict(vmem_budget=24 << 20, vmem_limit=40 << 20, fold_cap=32, cores=1)


def _pick_fold(input_dim: int, num_atoms: int, fold_cap: int) -> int:
    """fold with fold*input_dim <= 128 and (if possible) fold*num_atoms % 128 == 0."""
    fold_unit = 128 // math.gcd(num_atoms, 128)      # smallest fold giving 128-lane output
    lane_cap = max(1, 128 // max(1, input_dim))      # keep fd_in within one vreg of lanes
    cap = max(1, min(fold_cap, lane_cap))
    if cap >= fold_unit:
        return (cap // fold_unit) * fold_unit
    return cap


@functools.partial(jax.jit, static_argnames=("block_rows", "out_dtype"))
def fourier_pe(x, weight, bias, omega0, *, block_rows=8192, out_dtype=None):
    """x: (..., input_dim); weight: (num_atoms, input_dim); bias: (num_atoms,).

    Returns sin(omega0 * (x @ weight.T + bias)) with shape (..., num_atoms).
    """
    input_dim = x.shape[-1]
    num_atoms = weight.shape[0]
    lead_shape = x.shape[:-1]
    out_dt = jnp.dtype(out_dtype) if out_dtype is not None else x.dtype

    cfg = _tpu_config()
    fold = _pick_fold(input_dim, num_atoms, cfg["fold_cap"])
    fd_in = fold * input_dim
    fd_out = fold * num_atoms

    # --- flatten leading dims (native dtype; cast happens inside the kernel) ---
    x2d = x.reshape(-1, input_dim)
    n_rows = x2d.shape[0]
    m_rows = pl.cdiv(n_rows, fold)                         # folded row count

    # --- tile size from VMEM budget (double-buffered x + out tiles) ------------
    x_isz = jnp.dtype(x.dtype).itemsize
    o_isz = jnp.dtype(out_dt).itemsize
    bytes_per_row = 2 * (_round_up(fd_in, 128) * x_isz + fd_out * o_isz)
    max_block = max(8, (cfg["vmem_budget"] // bytes_per_row) // 8 * 8)
    block_target = max(8, min(block_rows, max_block) // 8 * 8)

    # --- adaptive grid / block (waste bounded by <8 folded rows per step) ------
    grid = max(1, pl.cdiv(m_rows, block_target))
    if cfg["cores"] > 1 and grid < cfg["cores"] and m_rows >= 8 * cfg["cores"]:
        grid = cfg["cores"]                                # keep both v7x TCs busy
    block = min(block_target, _round_up(pl.cdiv(m_rows, grid), 8))
    grid = pl.cdiv(m_rows, block)
    m_pad = grid * block

    # --- pad once, then fold rows into lane-dense kernel rows ------------------
    total_rows = m_pad * fold
    if total_rows != n_rows:
        x2d = jnp.pad(x2d, ((0, total_rows - n_rows), (0, 0)))
    xf = x2d.reshape(m_pad, fd_in)

    # --- fold omega0 into params; block-diagonal replicate for lane density ----
    omega = jnp.asarray(omega0, jnp.float32)
    w_scaled = omega * weight.T.astype(jnp.float32)        # (input_dim, num_atoms)
    w_big = jnp.kron(jnp.eye(fold, dtype=jnp.float32), w_scaled)     # (fd_in, fd_out)
    b_big = jnp.tile(omega * bias.astype(jnp.float32), fold).reshape(1, fd_out)

    cost = pl.CostEstimate(
        flops=2 * m_pad * fd_in * fd_out,
        transcendentals=m_pad * fd_out,
        bytes_accessed=(m_pad * fd_in * x_isz + m_pad * fd_out * o_isz
                        + fd_in * fd_out * 4 + fd_out * 4),
    )

    out = pl.pallas_call(
        _fourier_pe_kernel,
        out_shape=jax.ShapeDtypeStruct((m_pad, fd_out), out_dt),
        grid=(grid,),
        in_specs=[
            pl.BlockSpec((block, fd_in), lambda i: (i, 0)),    # x tile
            pl.BlockSpec((fd_in, fd_out), lambda i: (0, 0)),   # block-diag W (resident)
            pl.BlockSpec((1, fd_out), lambda i: (0, 0)),       # tiled bias  (resident)
        ],
        out_specs=pl.BlockSpec((block, fd_out), lambda i: (i, 0)),
        compiler_params=pltpu.CompilerParams(
            dimension_semantics=("parallel",),                 # megacore sharding on v7x
            vmem_limit_bytes=cfg["vmem_limit"]),
        cost_estimate=cost,
    )(xf, w_big, b_big)

    # --- unfold back to (N, num_atoms) and original leading shape ---------------
    out = out.reshape(total_rows, num_atoms)[:n_rows]
    return out.reshape(*lead_shape, num_atoms)


def fourier_pe_reference(x, weight, bias, omega0):
    return jnp.sin(omega0 * (x.astype(jnp.float32) @ weight.T.astype(jnp.float32)
                             + bias.astype(jnp.float32)))


if __name__ == "__main__":
    # FourierPE(num_atoms=32, input_dim=3, bias=True, omega0=30.0)
    input_dim = 3
    num_atoms = 32
    omega0 = 30.0

    key = jax.random.PRNGKey(0)
    kx, kw, kb = jax.random.split(key, 3)

    # x: batch of points (2, 64, 3) -> 128 rows after flatten; wrapper pads/slices.
    x = jax.random.normal(kx, (2, 64, input_dim), dtype=jnp.float32)

    # deterministic parameter init matching the module's __init__ distributions
    weight = jax.random.uniform(
        kw, (num_atoms, input_dim), jnp.float32,
        minval=-1.0 / input_dim, maxval=1.0 / input_dim)
    bound = 1.0 / (input_dim ** 0.5)
    bias = jax.random.uniform(
        kb, (num_atoms,), jnp.float32, minval=-bound, maxval=bound)

    out = fourier_pe(x, weight, bias, omega0)
    jax.block_until_ready(out)

    ref = fourier_pe_reference(x, weight, bias, omega0)
    assert out.shape == (2, 64, num_atoms)
    assert jnp.allclose(out, ref, atol=1e-5, rtol=1e-5)

    print("KERNEL_OK")
</pallas_src>

<mosaic_0001>
module attributes {stable_mosaic.version = 11 : i64} {
  func.func @_fourier_pe_kernel(%arg0: i32, %arg1: memref<8x96xf32, #tpu.memory_space<vmem>>, %arg2: memref<96x1024xf32, #tpu.memory_space<vmem>>, %arg3: memref<1x1024xf32, #tpu.memory_space<vmem>>, %arg4: memref<8x1024xf32, #tpu.memory_space<vmem>>) attributes {dimension_semantics = [#tpu.dimension_semantics<parallel>], iteration_bounds = array<i64: 1>, scalar_prefetch = 0 : i64, scratch_operands = 0 : i64, tpu.core_type = #tpu.core_type<tc>, window_params = [{transform_indices = @transform_0, window_bounds = array<i64: 8, 96>}, {pipeline_mode = #tpu.pipeline_mode<synchronous>, transform_indices = @transform_1, window_bounds = array<i64: 96, 1024>}, {pipeline_mode = #tpu.pipeline_mode<synchronous>, transform_indices = @transform_2, window_bounds = array<i64: 1, 1024>}, {transform_indices = @transform_3, window_bounds = array<i64: 8, 1024>}]} {
    %c0 = arith.constant 0 : index
    %c0_0 = arith.constant 0 : index
    %0 = vector.load %arg1[%c0, %c0_0] : memref<8x96xf32, #tpu.memory_space<vmem>>, vector<8x96xf32>
    %c0_1 = arith.constant 0 : index
    %c0_2 = arith.constant 0 : index
    %1 = vector.load %arg2[%c0_1, %c0_2] : memref<96x1024xf32, #tpu.memory_space<vmem>>, vector<96x1024xf32>
    %cst = arith.constant dense<0.000000e+00> : vector<8x1024xf32>
    %2 = tpu.matmul %0, %1, %cst {dimension_numbers = #tpu.dot_dimension_numbers<[1], [0], [0], [1], [0, 0, 1, 1], [], []>} : vector<8x96xf32>, vector<96x1024xf32>, vector<8x1024xf32> -> vector<8x1024xf32>
    %c0_3 = arith.constant 0 : index
    %c0_4 = arith.constant 0 : index
    %3 = vector.load %arg3[%c0_3, %c0_4] : memref<1x1024xf32, #tpu.memory_space<vmem>>, vector<1x1024xf32>
    %4 = vector.broadcast %3 : vector<1x1024xf32> to vector<8x1024xf32>
    %5 = arith.addf %2, %4 : vector<8x1024xf32>
    %6 = math.sin %5 : vector<8x1024xf32>
    %c0_5 = arith.constant 0 : index
    %c0_6 = arith.constant 0 : index
    %7 = vector.load %arg4[%c0_5, %c0_6] : memref<8x1024xf32, #tpu.memory_space<vmem>>, vector<8x1024xf32>
    tpu.vector_store %arg4[%c0_5, %c0_6], %6 {strides = array<i32>} : memref<8x1024xf32, #tpu.memory_space<vmem>>, vector<8x1024xf32>,
    return
  }
  func.func @transform_0(%arg0: i32) -> (i32, i32) {
    %c0_i32 = arith.constant 0 : i32
    %c0_i32_0 = arith.constant 0 : i32
    return %arg0, %c0_i32 : i32, i32
  }
  func.func @transform_1(%arg0: i32) -> (i32, i32) {
    %c0_i32 = arith.constant 0 : i32
    %c0_i32_0 = arith.constant 0 : i32
    %c0_i32_1 = arith.constant 0 : i32
    return %c0_i32, %c0_i32_0 : i32, i32
  }
  func.func @transform_2(%arg0: i32) -> (i32, i32) {
    %c0_i32 = arith.constant 0 : i32
    %c0_i32_0 = arith.constant 0 : i32
    %c0_i32_1 = arith.constant 0 : i32
    return %c0_i32, %c0_i32_0 : i32, i32
  }
  func.func @transform_3(%arg0: i32) -> (i32, i32) {
    %c0_i32 = arith.constant 0 : i32
    %c0_i32_0 = arith.constant 0 : i32
    return %arg0, %c0_i32 : i32, i32
  }
}

</mosaic_0001>

<llo_original>
// kernel: tile.8
$region0: #{tile.8}
  #allocation0 [shape = 's32[1]{0}', space=sflag, size = 0x4, scoped, tag = 'scoped memory for tile.8']
  %s0 = inlined_call_operand.vmem [shape: f32[32], index: 0, kind: input, shape index: {}]
  %s1 = inlined_call_operand.vmem [shape: f32[32,32], index: 1, kind: output, shape index: {}]
  // Predicated region
  $region2: #{tile.8} parent=0 // pred_check
    _
  $region3: #{tile.8} parent=0 // pred_check_branch
    %3 = sbr.rel (0) target = $region5
  $region4: #{tile.8} parent=0 // pred_region
    _
  $region5: #{tile.8} parent=0 // pred_fallthru
    _
  %v4 = vld [vmem:[%s0] ss:$0 sm:$0xff]
  %5 = vst [vmem:[%s1] sm:$0xff] %v4
  %s6 = scalar_lea.vmem %s1, 8
  %7 = vst [vmem:[%s6] sm:$0xff] %v4
  %s8 = scalar_lea.vmem %s1, 16
  %9 = vst [vmem:[%s8] sm:$0xff] %v4
  %s10 = scalar_lea.vmem %s1, 24
  %11 = vst [vmem:[%s10] sm:$0xff] %v4

// kernel: tile.9
$region0: #{tile.9}
  %s0 = inlined_call_operand.vmem [shape: f32[32,32], index: 0, kind: input, shape index: {}]
  %s1 = inlined_call_operand.vmem [shape: f32[1,1024], index: 1, kind: output, shape index: {}]
  $region1: #{tile.9} parent=0
    #allocation0 [shape = 'u8[32768]{0}', space=vmem, size = 0x8000, scoped, tag = 'scoped mem for output reshape']
    %v2 = vld [vmem:[%s0] ss:$4 sm:$0xff]
    %vm3 = vcmask 261120
    %4 = vst.msk [vmem:[#allocation0] ss:$8 sm:$0xf] %vm3, %v2
    %5 = vst.msk [vmem:[#allocation0] ss:$8 sm:$0xf0] %vm3, %v2
    %s6 = scalar_lea.vmem %s0, 3
    %v7 = vld [vmem:[%s6] ss:$4 sm:$0xff]
    %8 = vrot.lane.b32.xlu0 %v7, 96
    %v9 = vpop.permute.xlu0 %8
    %vm10 = vcmask 1048320
    %11 = vst.msk [vmem:[#allocation0] ss:$8 sm:$0xf] %vm10, %v9
    %12 = vst.msk [vmem:[#allocation0] ss:$8 sm:$0xf0] %vm10, %v9
    %s13 = scalar_lea.vmem %s0, 2
    %v14 = vld [vmem:[%s13] ss:$4 sm:$0xff]
    %15 = vrot.lane.b32.xlu0 %v14, 64
    %v16 = vpop.permute.xlu0 %15
    %vm17 = vcmask 785920
    %18 = vst.msk [vmem:[#allocation0] ss:$8 sm:$0xf] %vm17, %v16
    %19 = vst.msk [vmem:[#allocation0] ss:$8 sm:$0xf0] %vm17, %v16
    %s20 = scalar_lea.vmem %s0, 1
    %v21 = vld [vmem:[%s20] ss:$4 sm:$0xff]
    %22 = vrot.lane.b32.xlu0 %v21, 32
    %v23 = vpop.permute.xlu0 %22
    %vm24 = vcmask 523520
    %25 = vst.msk [vmem:[#allocation0] ss:$8 sm:$0xf] %vm24, %v23
    %26 = vst.msk [vmem:[#allocation0] ss:$8 sm:$0xf0] %vm24, %v23
    %s28 = sshllo.u32 0, 1
    %v30 = vld [vmem:[#allocation0] sm:%s28]
    %s31 = sshllo.u32 0, 1
    %32 = vst [vmem:[%s1] sm:%s31] %v30
    %s33 = scalar_lea.vmem [#allocation0], 8
    %v34 = vld [vmem:[%s33] sm:%s28]
    %s35 = sshllo.u32 0, 1
    %s36 = scalar_lea.vmem %s1, 1
    %37 = vst [vmem:[%s36] sm:%s35] %v34
    %s38 = scalar_lea.vmem [#allocation0], 16
    %v39 = vld [vmem:[%s38] sm:%s28]
    %s40 = sshllo.u32 0, 1
    %s41 = smul.addr 1, 2
    %s42 = scalar_lea.vmem %s1, %s41
    %43 = vst [vmem:[%s42] sm:%s40] %v39
    %s44 = scalar_lea.vmem [#allocation0], 24
    %v45 = vld [vmem:[%s44] sm:%s28]
    %s46 = sshllo.u32 0, 1
    %s47 = smul.addr 1, 3
    %s48 = scalar_lea.vmem %s1, %s47
    %49 = vst [vmem:[%s48] sm:%s46] %v45
    %s50 = scalar_lea.vmem [#allocation0], 32
    %v51 = vld [vmem:[%s50] sm:%s28]
    %s52 = sshllo.u32 0, 1
    %s53 = smul.addr 1, 4
    %s54 = scalar_lea.vmem %s1, %s53
    %55 = vst [vmem:[%s54] sm:%s52] %v51
    %s56 = scalar_lea.vmem [#allocation0], 40
    %v57 = vld [vmem:[%s56] sm:%s28]
    %s58 = sshllo.u32 0, 1
    %s59 = smul.addr 1, 5
    %s60 = scalar_lea.vmem %s1, %s59
    %61 = vst [vmem:[%s60] sm:%s58] %v57
    %s62 = scalar_lea.vmem [#allocation0], 48
    %v63 = vld [vmem:[%s62] sm:%s28]
    %s64 = sshllo.u32 0, 1
    %s65 = smul.addr 1, 6
    %s66 = scalar_lea.vmem %s1, %s65
    %67 = vst [vmem:[%s66] sm:%s64] %v63
    %s68 = scalar_lea.vmem [#allocation0], 56
    %v69 = vld [vmem:[%s68] sm:%s28]
    %s70 = sshllo.u32 0, 1
    %s71 = smul.addr 1, 7
    %s72 = scalar_lea.vmem %s1, %s71
    %73 = vst [vmem:[%s72] sm:%s70] %v69

// kernel: fourier_pe.1
$region0: #{fourier_pe.1}
  #allocation0 [shape = 'u32[]', space=smem, size = 0x4, offset = 0x4, fixed_abs, tag = 'smem constant byte address 0x4 - core index']
  #allocation1 [shape = 'u32[144,128]{1,0:T(1,128)}', space=vmem, size = 0x12000, scoped, tag = 'internal scratch']
  %s0 = inlined_call_operand.vmem [shape: f32[8,96], index: 0, kind: input, shape index: {}]
  %s1 = inlined_call_operand.vmem [shape: f32[96,1024], index: 1, kind: input, shape index: {}]
  %s2 = inlined_call_operand.vmem [shape: f32[1,1024], index: 2, kind: input, shape index: {}]
  %s3 = inlined_call_operand.vmem [shape: f32[8,1024], index: 3, kind: output, shape index: {}]
  %s4 = sld [smem:[#allocation0]]
  $region22: #{fourier_pe.1} parent=0
    _
  %s6 = ssub.s32 1, %s4
  %s7 = scalar_select 0, %s6, %s4
  // Predicated region
  $region2: #{fourier_pe.1} parent=0 // pred_check
    _
  $region3: #{fourier_pe.1} parent=0 // pred_check_branch
    %9 = sbr.rel (0) target = $region5
  $region4: #{fourier_pe.1} parent=0 // pred_region
    _
  $region5: #{fourier_pe.1} parent=0 // pred_fallthru
    _
  // Predicated region
  $region6: #{fourier_pe.1} parent=0 // pred_check
    _
  $region7: #{fourier_pe.1} parent=0 // pred_check_branch
    %11 = sbr.rel (0) target = $region9
  $region8: #{fourier_pe.1} parent=0 // pred_region
    _
  $region9: #{fourier_pe.1} parent=0 // pred_fallthru
    _
  // Predicated region
  $region10: #{fourier_pe.1} parent=0 // pred_check
    _
  $region11: #{fourier_pe.1} parent=0 // pred_check_branch
    %13 = sbr.rel (0) target = $region13
  $region12: #{fourier_pe.1} parent=0 // pred_region
    _
  $region13: #{fourier_pe.1} parent=0 // pred_fallthru
    _
  %v14 = vld [vmem:[%s0] sm:$0xff]
  %v15 = vld [vmem:[%s1] sm:$0xff]
  %v16 = vld [vmem:[%s1 + $0x8] sm:$0xff]
  %v17 = vld [vmem:[%s1 + $0x10] sm:$0xff]
  %v18 = vld [vmem:[%s1 + $0x18] sm:$0xff]
  %v19 = vld [vmem:[%s1 + $0x20] sm:$0xff]
  %v20 = vld [vmem:[%s1 + $0x28] sm:$0xff]
  %v21 = vld [vmem:[%s1 + $0x30] sm:$0xff]
  %v22 = vld [vmem:[%s1 + $0x38] sm:$0xff]
  %v23 = vld [vmem:[%s1 + $0x40] sm:$0xff]
  %v24 = vld [vmem:[%s1 + $0x48] sm:$0xff]
  %v25 = vld [vmem:[%s1 + $0x50] sm:$0xff]
  %v26 = vld [vmem:[%s1 + $0x58] sm:$0xff]
  %v27 = vld [vmem:[%s1 + $0x60] sm:$0xff]
  %v28 = vld [vmem:[%s1 + $0x68] sm:$0xff]
  %v29 = vld [vmem:[%s1 + $0x70] sm:$0xff]
  %v30 = vld [vmem:[%s1 + $0x78] sm:$0xff]
  %v31 = vld [vmem:[%s1 + $0x80] sm:$0xff]
  %v32 = vld [vmem:[%s1 + $0x88] sm:$0xff]
  %v33 = vld [vmem:[%s1 + $0x90] sm:$0xff]
  %v34 = vld [vmem:[%s1 + $0x98] sm:$0xff]
  %v35 = vld [vmem:[%s1 + $0xa0] sm:$0xff]
  %v36 = vld [vmem:[%s1 + $0xa8] sm:$0xff]
  %v37 = vld [vmem:[%s1 + $0xb0] sm:$0xff]
  %v38 = vld [vmem:[%s1 + $0xb8] sm:$0xff]
  %v39 = vld [vmem:[%s1 + $0xc0] sm:$0xff]
  %v40 = vld [vmem:[%s1 + $0xc8] sm:$0xff]
  %v41 = vld [vmem:[%s1 + $0xd0] sm:$0xff]
  %v42 = vld [vmem:[%s1 + $0xd8] sm:$0xff]
  %v43 = vld [vmem:[%s1 + $0xe0] sm:$0xff]
  %v44 = vld [vmem:[%s1 + $0xe8] sm:$0xff]
  %v45 = vld [vmem:[%s1 + $0xf0] sm:$0xff]
  %v46 = vld [vmem:[%s1 + $0xf8] sm:$0xff]
  %v47 = vld [vmem:[%s1 + $0x100] sm:$0xff]
  %v48 = vld [vmem:[%s1 + $0x108] sm:$0xff]
  %v49 = vld [vmem:[%s1 + $0x110] sm:$0xff]
  %v50 = vld [vmem:[%s1 + $0x118] sm:$0xff]
  %v51 = vld [vmem:[%s1 + $0x120] sm:$0xff]
  %v52 = vld [vmem:[%s1 + $0x128] sm:$0xff]
  %v53 = vld [vmem:[%s1 + $0x130] sm:$0xff]
  %v54 = vld [vmem:[%s1 + $0x138] sm:$0xff]
  %v55 = vld [vmem:[%s1 + $0x140] sm:$0xff]
  %v56 = vld [vmem:[%s1 + $0x148] sm:$0xff]
  %v57 = vld [vmem:[%s1 + $0x150] sm:$0xff]
  %v58 = vld [vmem:[%s1 + $0x158] sm:$0xff]
  %v59 = vld [vmem:[%s1 + $0x160] sm:$0xff]
  %v60 = vld [vmem:[%s1 + $0x168] sm:$0xff]
  %v61 = vld [vmem:[%s1 + $0x170] sm:$0xff]
  %v62 = vld [vmem:[%s1 + $0x178] sm:$0xff]
  %v63 = vld [vmem:[%s1 + $0x180] sm:$0xff]
  %v64 = vld [vmem:[%s1 + $0x188] sm:$0xff]
  %v65 = vld [vmem:[%s1 + $0x190] sm:$0xff]
  %v66 = vld [vmem:[%s1 + $0x198] sm:$0xff]
  %v67 = vld [vmem:[%s1 + $0x1a0] sm:$0xff]
  %v68 = vld [vmem:[%s1 + $0x1a8] sm:$0xff]
  %v69 = vld [vmem:[%s1 + $0x1b0] sm:$0xff]
  %v70 = vld [vmem:[%s1 + $0x1b8] sm:$0xff]
  %v71 = vld [vmem:[%s1 + $0x1c0] sm:$0xff]
  %v72 = vld [vmem:[%s1 + $0x1c8] sm:$0xff]
  %v73 = vld [vmem:[%s1 + $0x1d0] sm:$0xff]
  %v74 = vld [vmem:[%s1 + $0x1d8] sm:$0xff]
  %v75 = vld [vmem:[%s1 + $0x1e0] sm:$0xff]
  %v76 = vld [vmem:[%s1 + $0x1e8] sm:$0xff]
  %v77 = vld [vmem:[%s1 + $0x1f0] sm:$0xff]
  %v78 = vld [vmem:[%s1 + $0x1f8] sm:$0xff]
  %v79 = vld [vmem:[%s1 + $0x200] sm:$0xff]
  %v80 = vld [vmem:[%s1 + $0x208] sm:$0xff]
  %v81 = vld [vmem:[%s1 + $0x210] sm:$0xff]
  %v82 = vld [vmem:[%s1 + $0x218] sm:$0xff]
  %v83 = vld [vmem:[%s1 + $0x220] sm:$0xff]
  %v84 = vld [vmem:[%s1 + $0x228] sm:$0xff]
  %v85 = vld [vmem:[%s1 + $0x230] sm:$0xff]
  %v86 = vld [vmem:[%s1 + $0x238] sm:$0xff]
  %v87 = vld [vmem:[%s1 + $0x240] sm:$0xff]
  %v88 = vld [vmem:[%s1 + $0x248] sm:$0xff]
  %v89 = vld [vmem:[%s1 + $0x250] sm:$0xff]
  %v90 = vld [vmem:[%s1 + $0x258] sm:$0xff]
  %v91 = vld [vmem:[%s1 + $0x260] sm:$0xff]
  %v92 = vld [vmem:[%s1 + $0x268] sm:$0xff]
  %v93 = vld [vmem:[%s1 + $0x270] sm:$0xff]
  %v94 = vld [vmem:[%s1 + $0x278] sm:$0xff]
  %v95 = vld [vmem:[%s1 + $0x280] sm:$0xff]
  %v96 = vld [vmem:[%s1 + $0x288] sm:$0xff]
  %v97 = vld [vmem:[%s1 + $0x290] sm:$0xff]
  %v98 = vld [vmem:[%s1 + $0x298] sm:$0xff]
  %v99 = vld [vmem:[%s1 + $0x2a0] sm:$0xff]
  %v100 = vld [vmem:[%s1 + $0x2a8] sm:$0xff]
  %v101 = vld [vmem:[%s1 + $0x2b0] sm:$0xff]
  %v102 = vld [vmem:[%s1 + $0x2b8] sm:$0xff]
  %v103 = vld [vmem:[%s1 + $0x2c0] sm:$0xff]
  %v104 = vld [vmem:[%s1 + $0x2c8] sm:$0xff]
  %v105 = vld [vmem:[%s1 + $0x2d0] sm:$0xff]
  %v106 = vld [vmem:[%s1 + $0x2d8] sm:$0xff]
  %v107 = vld [vmem:[%s1 + $0x2e0] sm:$0xff]
  %v108 = vld [vmem:[%s1 + $0x2e8] sm:$0xff]
  %v109 = vld [vmem:[%s1 + $0x2f0] sm:$0xff]
  %v110 = vld [vmem:[%s1 + $0x2f8] sm:$0xff]
  %v111 = vld [vmem:[%s2] sm:$0xff]
  %v113 = vlaneseq
  %v114 = vshrl.u32 %v113, 7
  %v115 = vsub.s32 0, %v114
  %v116 = vrot.slane %v111, %v115
  %v117 = vlaneseq
  %v118 = vshrl.u32 %v117, 7
  %v119 = vsub.s32 1, %v118
  %v120 = vrot.slane %v111, %v119
  %v121 = vlaneseq
  %v122 = vshrl.u32 %v121, 7
  %v123 = vsub.s32 2, %v122
  %v124 = vrot.slane %v111, %v123
  %v125 = vlaneseq
  %v126 = vshrl.u32 %v125, 7
  %v127 = vsub.s32 3, %v126
  %v128 = vrot.slane %v111, %v127
  %v129 = vlaneseq
  %v130 = vshrl.u32 %v129, 7
  %v131 = vsub.s32 4, %v130
  %v132 = vrot.slane %v111, %v131
  %v133 = vlaneseq
  %v134 = vshrl.u32 %v133, 7
  %v135 = vsub.s32 5, %v134
  %v136 = vrot.slane %v111, %v135
  %v137 = vlaneseq
  %v138 = vshrl.u32 %v137, 7
  %v139 = vsub.s32 6, %v138
  %v140 = vrot.slane %v111, %v139
  %v141 = vlaneseq
  %v142 = vshrl.u32 %v141, 7
  %v143 = vsub.s32 7, %v142
  %v144 = vrot.slane %v111, %v143
  %vm153 = vcmask 785408
  %v155 = vsel %vm153, %v14, 0
  %157 = vmatprep.subr.mxu0 %v16
  %158 = vmatpush1.msra.mxu0 %v15
  %159 = vmatprep.subr.mxu0 %v24
  %160 = vmatpush1.msra.mxu0 %v23
  %161 = vmatprep.subr.mxu0 %v32
  %162 = vmatpush1.msra.mxu0 %v31
  %163 = vmatprep.subr.mxu0 %v40
  %164 = vmatpush1.msra.mxu0 %v39
  %165 = vmatprep.subr.mxu0 %v48
  %166 = vmatpush1.msra.mxu0 %v47
  %167 = vmatprep.subr.mxu0 %v56
  %168 = vmatpush1.msra.mxu0 %v55
  %169 = vmatprep.subr.mxu0 %v64
  %170 = vmatpush1.msra.mxu0 %v63
  %171 = vmatprep.subr.mxu0 %v72
  %172 = vmatpush1.msra.mxu0 %v71
  %173 = vmatprep.subr.mxu0 %v80
  %174 = vmatpush1.msra.mxu0 %v79
  %175 = vmatprep.subr.mxu0 %v88
  %176 = vmatpush1.msra.mxu0 %v87
  %177 = vmatprep.subr.mxu0 %v96
  %178 = vmatpush1.msra.mxu0 %v95
  %179 = vmatprep.subr.mxu0 %v104
  %180 = vmatpush1.msra.mxu0 %v103
  %181 = vmatprep.subr.mxu0 0.0
  %182 = vmatpush1.msra.mxu0 0.0
  %183 = vmatprep.subr.mxu0 0.0
  %184 = vmatpush1.msra.mxu0 0.0
  %185 = vmatprep.subr.mxu0 0.0
  %186 = vmatpush1.msra.mxu0 0.0
  %187 = vmatprep.subr.mxu0 0.0
  %188 = vmatpush1.msra.mxu0 0.0
  %189 = vmatprep.subr.mxu0 0.0
  %190 = vmatpush1.msra.mxu0 0.0
  %191 = vmatprep.subr.mxu0 0.0
  %192 = vmatpush1.msra.mxu0 0.0
  %193 = vmatprep.subr.mxu0 0.0
  %194 = vmatpush1.msra.mxu0 0.0
  %195 = vmatprep.subr.mxu0 0.0
  %196 = vmatpush1.msra.mxu0 0.0
  %197 = vmatprep.subr.mxu0 0.0
  %198 = vmatpush1.msra.mxu0 0.0
  %199 = vmatprep.subr.mxu0 0.0
  %200 = vmatpush1.msra.mxu0 0.0
  %201 = vmatprep.subr.mxu0 0.0
  %202 = vmatpush1.msra.mxu0 0.0
  %203 = vmatprep.subr.mxu0 0.0
  %204 = vmatpush1.msra.mxu0 0.0
  %205 = vmatprep.subr.mxu0 0.0
  %206 = vmatpush1.msra.mxu0 0.0
  %207 = vmatprep.subr.mxu0 0.0
  %208 = vmatpush1.msra.mxu0 0.0
  %209 = vmatprep.subr.mxu0 0.0
  %210 = vmatpush1.msra.mxu0 0.0
  %211 = vmatprep.subr.mxu0 0.0
  %212 = vmatpush1.msra.mxu0 0.0
  %213 = vmatprep.subr.mxu0 0.0
  %214 = vmatpush1.msra.mxu0 0.0
  %215 = vmatprep.subr.mxu0 0.0
  %216 = vmatpush1.msra.mxu0 0.0
  %217 = vmatprep.subr.mxu0 0.0
  %218 = vmatpush1.msra.mxu0 0.0
  %219 = vmatprep.subr.mxu0 0.0
  %220 = vmatpush1.msra.mxu0 0.0
  %221 = vmatprep.mubr.f32.mxu0 0.0
  %222 = vmatmul.mubr.f32.gmra.mrb[0].mxu0 %v155
  %v223 = vpop.f32.mrb[0].mxu0
  %v224 = vadd.f32 %v116, %v223
  %v225 = vpop.f32.mrb[0].mxu0
  %v226 = vadd.f32 %v120, %v225
  %227 = vdwg.mxu0
  %228 = vmatprep.subr.mxu0 %v18
  %229 = vmatpush1.msra.mxu0 %v17
  %230 = vmatprep.subr.mxu0 %v26
  %231 = vmatpush1.msra.mxu0 %v25
  %232 = vmatprep.subr.mxu0 %v34
  %233 = vmatpush1.msra.mxu0 %v33
  %234 = vmatprep.subr.mxu0 %v42
  %235 = vmatpush1.msra.mxu0 %v41
  %236 = vmatprep.subr.mxu0 %v50
  %237 = vmatpush1.msra.mxu0 %v49
  %238 = vmatprep.subr.mxu0 %v58
  %239 = vmatpush1.msra.mxu0 %v57
  %240 = vmatprep.subr.mxu0 %v66
  %241 = vmatpush1.msra.mxu0 %v65
  %242 = vmatprep.subr.mxu0 %v74
  %243 = vmatpush1.msra.mxu0 %v73
  %244 = vmatprep.subr.mxu0 %v82
  %245 = vmatpush1.msra.mxu0 %v81
  %246 = vmatprep.subr.mxu0 %v90
  %247 = vmatpush1.msra.mxu0 %v89
  %248 = vmatprep.subr.mxu0 %v98
  %249 = vmatpush1.msra.mxu0 %v97
  %250 = vmatprep.subr.mxu0 %v106
  %251 = vmatpush1.msra.mxu0 %v105
  %252 = vmatprep.subr.mxu0 0.0
  %253 = vmatpush1.msra.mxu0 0.0
  %254 = vmatprep.subr.mxu0 0.0
  %255 = vmatpush1.msra.mxu0 0.0
  %256 = vmatprep.subr.mxu0 0.0
  %257 = vmatpush1.msra.mxu0 0.0
  %258 = vmatprep.subr.mxu0 0.0
  %259 = vmatpush1.msra.mxu0 0.0
  %260 = vmatprep.subr.mxu0 0.0
  %261 = vmatpush1.msra.mxu0 0.0
  %262 = vmatprep.subr.mxu0 0.0
  %263 = vmatpush1.msra.mxu0 0.0
  %264 = vmatprep.subr.mxu0 0.0
  %265 = vmatpush1.msra.mxu0 0.0
  %266 = vmatprep.subr.mxu0 0.0
  %267 = vmatpush1.msra.mxu0 0.0
  %268 = vmatprep.subr.mxu0 0.0
  %269 = vmatpush1.msra.mxu0 0.0
  %270 = vmatprep.subr.mxu0 0.0
  %271 = vmatpush1.msra.mxu0 0.0
  %272 = vmatprep.subr.mxu0 0.0
  %273 = vmatpush1.msra.mxu0 0.0
  %274 = vmatprep.subr.mxu0 0.0
  %275 = vmatpush1.msra.mxu0 0.0
  %276 = vmatprep.subr.mxu0 0.0
  %277 = vmatpush1.msra.mxu0 0.0
  %278 = vmatprep.subr.mxu0 0.0
  %279 = vmatpush1.msra.mxu0 0.0
  %280 = vmatprep.subr.mxu0 0.0
  %281 = vmatpush1.msra.mxu0 0.0
  %282 = vmatprep.subr.mxu0 0.0
  %283 = vmatpush1.msra.mxu0 0.0
  %284 = vmatprep.subr.mxu0 0.0
  %285 = vmatpush1.msra.mxu0 0.0
  %286 = vmatprep.subr.mxu0 0.0
  %287 = vmatpush1.msra.mxu0 0.0
  %288 = vmatprep.subr.mxu0 0.0
  %289 = vmatpush1.msra.mxu0 0.0
  %290 = vmatprep.subr.mxu0 0.0
  %291 = vmatpush1.msra.mxu0 0.0
  %292 = vmatprep.mubr.f32.mxu0 0.0
  %293 = vmatmul.mubr.f32.gmra.mrb[0].mxu0 %v155
  %v294 = vpop.f32.mrb[0].mxu0
  %v295 = vadd.f32 %v124, %v294
  %v296 = vpop.f32.mrb[0].mxu0
  %v297 = vadd.f32 %v128, %v296
  %298 = vdwg.mxu0
  %299 = vmatprep.subr.mxu0 %v20
  %300 = vmatpush1.msra.mxu0 %v19
  %301 = vmatprep.subr.mxu0 %v28
  %302 = vmatpush1.msra.mxu0 %v27
  %303 = vmatprep.subr.mxu0 %v36
  %304 = vmatpush1.msra.mxu0 %v35
  %305 = vmatprep.subr.mxu0 %v44
  %306 = vmatpush1.msra.mxu0 %v43
  %307 = vmatprep.subr.mxu0 %v52
  %308 = vmatpush1.msra.mxu0 %v51
  %309 = vmatprep.subr.mxu0 %v60
  %310 = vmatpush1.msra.mxu0 %v59
  %311 = vmatprep.subr.mxu0 %v68
  %312 = vmatpush1.msra.mxu0 %v67
  %313 = vmatprep.subr.mxu0 %v76
  %314 = vmatpush1.msra.mxu0 %v75
  %315 = vmatprep.subr.mxu0 %v84
  %316 = vmatpush1.msra.mxu0 %v83
  %317 = vmatprep.subr.mxu0 %v92
  %318 = vmatpush1.msra.mxu0 %v91
  %319 = vmatprep.subr.mxu0 %v100
  %320 = vmatpush1.msra.mxu0 %v99
  %321 = vmatprep.subr.mxu0 %v108
  %322 = vmatpush1.msra.mxu0 %v107
  %323 = vmatprep.subr.mxu0 0.0
  %324 = vmatpush1.msra.mxu0 0.0
  %325 = vmatprep.subr.mxu0 0.0
  %326 = vmatpush1.msra.mxu0 0.0
  %327 = vmatprep.subr.mxu0 0.0
  %328 = vmatpush1.msra.mxu0 0.0
  %329 = vmatprep.subr.mxu0 0.0
  %330 = vmatpush1.msra.mxu0 0.0
  %331 = vmatprep.subr.mxu0 0.0
  %332 = vmatpush1.msra.mxu0 0.0
  %333 = vmatprep.subr.mxu0 0.0
  %334 = vmatpush1.msra.mxu0 0.0
  %335 = vmatprep.subr.mxu0 0.0
  %336 = vmatpush1.msra.mxu0 0.0
  %337 = vmatprep.subr.mxu0 0.0
  %338 = vmatpush1.msra.mxu0 0.0
  %339 = vmatprep.subr.mxu0 0.0
  %340 = vmatpush1.msra.mxu0 0.0
  %341 = vmatprep.subr.mxu0 0.0
  %342 = vmatpush1.msra.mxu0 0.0
  %343 = vmatprep.subr.mxu0 0.0
  %344 = vmatpush1.msra.mxu0 0.0
  %345 = vmatprep.subr.mxu0 0.0
  %346 = vmatpush1.msra.mxu0 0.0
  %347 = vmatprep.subr.mxu0 0.0
  %348 = vmatpush1.msra.mxu0 0.0
  %349 = vmatprep.subr.mxu0 0.0
  %350 = vmatpush1.msra.mxu0 0.0
  %351 = vmatprep.subr.mxu0 0.0
  %352 = vmatpush1.msra.mxu0 0.0
  %353 = vmatprep.subr.mxu0 0.0
  %354 = vmatpush1.msra.mxu0 0.0
  %355 = vmatprep.subr.mxu0 0.0
  %356 = vmatpush1.msra.mxu0 0.0
  %357 = vmatprep.subr.mxu0 0.0
  %358 = vmatpush1.msra.mxu0 0.0
  %359 = vmatprep.subr.mxu0 0.0
  %360 = vmatpush1.msra.mxu0 0.0
  %361 = vmatprep.subr.mxu0 0.0
  %362 = vmatpush1.msra.mxu0 0.0
  %363 = vmatprep.mubr.f32.mxu0 0.0
  %364 = vmatmul.mubr.f32.gmra.mrb[0].mxu0 %v155
  %v365 = vpop.f32.mrb[0].mxu0
  %v366 = vadd.f32 %v132, %v365
  %v367 = vpop.f32.mrb[0].mxu0
  %v368 = vadd.f32 %v136, %v367
  %369 = vdwg.mxu0
  %370 = vmatprep.subr.mxu0 %v22
  %371 = vmatpush1.msra.mxu0 %v21
  %372 = vmatprep.subr.mxu0 %v30
  %373 = vmatpush1.msra.mxu0 %v29
  %374 = vmatprep.subr.mxu0 %v38
  %375 = vmatpush1.msra.mxu0 %v37
  %376 = vmatprep.subr.mxu0 %v46
  %377 = vmatpush1.msra.mxu0 %v45
  %378 = vmatprep.subr.mxu0 %v54
  %379 = vmatpush1.msra.mxu0 %v53
  %380 = vmatprep.subr.mxu0 %v62
  %381 = vmatpush1.msra.mxu0 %v61
  %382 = vmatprep.subr.mxu0 %v70
  %383 = vmatpush1.msra.mxu0 %v69
  %384 = vmatprep.subr.mxu0 %v78
  %385 = vmatpush1.msra.mxu0 %v77
  %386 = vmatprep.subr.mxu0 %v86
  %387 = vmatpush1.msra.mxu0 %v85
  %388 = vmatprep.subr.mxu0 %v94
  %389 = vmatpush1.msra.mxu0 %v93
  %390 = vmatprep.subr.mxu0 %v102
  %391 = vmatpush1.msra.mxu0 %v101
  %392 = vmatprep.subr.mxu0 %v110
  %393 = vmatpush1.msra.mxu0 %v109
  %394 = vmatprep.subr.mxu0 0.0
  %395 = vmatpush1.msra.mxu0 0.0
  %396 = vmatprep.subr.mxu0 0.0
  %397 = vmatpush1.msra.mxu0 0.0
  %398 = vmatprep.subr.mxu0 0.0
  %399 = vmatpush1.msra.mxu0 0.0
  %400 = vmatprep.subr.mxu0 0.0
  %401 = vmatpush1.msra.mxu0 0.0
  %402 = vmatprep.subr.mxu0 0.0
  %403 = vmatpush1.msra.mxu0 0.0
  %404 = vmatprep.subr.mxu0 0.0
  %405 = vmatpush1.msra.mxu0 0.0
  %406 = vmatprep.subr.mxu0 0.0
  %407 = vmatpush1.msra.mxu0 0.0
  %408 = vmatprep.subr.mxu0 0.0
  %409 = vmatpush1.msra.mxu0 0.0
  %410 = vmatprep.subr.mxu0 0.0
  %411 = vmatpush1.msra.mxu0 0.0
  %412 = vmatprep.subr.mxu0 0.0
  %413 = vmatpush1.msra.mxu0 0.0
  %414 = vmatprep.subr.mxu0 0.0
  %415 = vmatpush1.msra.mxu0 0.0
  %416 = vmatprep.subr.mxu0 0.0
  %417 = vmatpush1.msra.mxu0 0.0
  %418 = vmatprep.subr.mxu0 0.0
  %419 = vmatpush1.msra.mxu0 0.0
  %420 = vmatprep.subr.mxu0 0.0
  %421 = vmatpush1.msra.mxu0 0.0
  %422 = vmatprep.subr.mxu0 0.0
  %423 = vmatpush1.msra.mxu0 0.0
  %424 = vmatprep.subr.mxu0 0.0
  %425 = vmatpush1.msra.mxu0 0.0
  %426 = vmatprep.subr.mxu0 0.0
  %427 = vmatpush1.msra.mxu0 0.0
  %428 = vmatprep.subr.mxu0 0.0
  %429 = vmatpush1.msra.mxu0 0.0
  %430 = vmatprep.subr.mxu0 0.0
  %431 = vmatpush1.msra.mxu0 0.0
  %432 = vmatprep.subr.mxu0 0.0
  %433 = vmatpush1.msra.mxu0 0.0
  %434 = vmatprep.mubr.f32.mxu0 0.0
  %435 = vmatmul.mubr.f32.gmra.mrb[0].mxu0 %v155
  %v436 = vpop.f32.mrb[0].mxu0
  %v437 = vadd.f32 %v140, %v436
  %v438 = vpop.f32.mrb[0].mxu0
  %v439 = vadd.f32 %v144, %v438
  %440 = vdwg.mxu0
  %v441 = vand.u32 2147483647, %v224
  %vm442 = vcmp.le.f32.partialorder %v441, 0.7853982
  %vm443 = vcmp.lt.s32.totalorder %v224, 0
  %v444 = vand.u32 %v224, 2139095040
  %v445 = vshrl.u32 %v444, 23
  %v446 = vsub.s32 %v445, 127
  %v447 = vand.u32 2147483647, %v224
  %v448 = vand.u32 %v447, 8388607
  %v449 = vor.u32 %v448, 8388608
  %v450 = vsub.s32 0, %v449
  %v451 = vadd.s32 %v446, 1
  %vm452 = vcmp.gt.s32.totalorder %v451, 0
  %v453 = vsel %vm452, %v451, 0
  %v454 = vshrl.u32 %v453, 5
  %v455 = vand.u32 %v453, 31
  %v456 = vsub.s32 32, %v455
  %v457 = vshrl.u32 683565275, %v456
  %v458 = vshll.u32 683565275, %v455
  %v459 = vshrl.u32 2475754826, %v456
  %v460 = vor.u32 %v458, %v459
  %v461 = vshll.u32 2475754826, %v455
  %v462 = vshrl.u32 2131351028, %v456
  %v463 = vor.u32 %v461, %v462
  %v464 = vshll.u32 2131351028, %v455
  %v465 = vshrl.u32 2102212464, %v456
  %v466 = vor.u32 %v464, %v465
  %v467 = vshll.u32 2102212464, %v455
  %v468 = vshrl.u32 920167782, %v456
  %v469 = vor.u32 %v467, %v468
  %v470 = vshll.u32 920167782, %v455
  %v471 = vshrl.u32 1326507024, %v456
  %v472 = vor.u32 %v470, %v471
  %vm473 = vcmp.lt.s32.totalorder %v454, 1
  %vm474 = vcmp.lt.s32.totalorder %v454, 2
  %vm475 = vcmp.lt.s32.totalorder %v454, 3
  %vm476 = vcmp.lt.s32.totalorder %v454, 4
  %v477 = vsel %vm473, %v457, %v460
  %v478 = vsel %vm476, %v466, 2102212464
  %v479 = vsel %vm475, %v463, %v478
  %v480 = vsel %vm474, %v477, %v479
  %v481 = vsel %vm473, %v460, %v463
  %v482 = vsel %vm476, %v469, 920167782
  %v483 = vsel %vm475, %v466, %v482
  %v484 = vsel %vm474, %v481, %v483
  %v485 = vsel %vm473, %v463, %v466
  %v486 = vsel %vm476, %v472, 1326507024
  %v487 = vsel %vm475, %v469, %v486
  %v488 = vsel %vm474, %v485, %v487
  %v489 = vshll.u32 %v449, 8
  %v490 = vmul.u32.u64.compose %v489, %v488
  %v491 = vextract.low.u32 %v490
  %v492 = vextract.high.u32 %v490
  %v493 = vmul.u32.u64.compose %v489, %v484
  %v494 = vextract.low.u32 %v493
  %v495 = vextract.high.u32 %v493
  %v496 = vmul.u32 %v489, %v480
  %v497 = vadd.s32 %v492, %v494
  %vm498 = vc.u32 %v492, %v494
  %v499 = vadd.s32 %v495, 1
  %v500 = vsel %vm498, %v499, %v495
  %v501 = vadd.s32 %v496, %v500
  %v502 = vadd.s32 %v501, 536870912
  %v503 = vshrl.u32 %v502, 30
  %v504 = vshll.u32 %v503, 30
  %v505 = vsub.s32 %v501, %v504
  %vm506 = vcmp.lt.s32.totalorder %v505, 0
  %v507 = vsub.s32 0, %v505
  %v508 = vsel %vm506, %v507, %v505
  %v509 = vclz %v508
  %v510 = vsub.s32 %v509, 2
  %vm511 = vcmp.gt.s32.totalorder 0, %v510
  %v512 = vsel %vm511, 0, %v510
  %v513 = vsub.s32 32, %v512
  %v514 = vshll.u32 %v505, %v512
  %v515 = vshrl.u32 %v497, %v513
  %v516 = vor.u32 %v514, %v515
  %v517 = vsub.s32 4294967266, %v512
  %v518 = vadd.s32 %v517, 127
  %v519 = vshll.u32 %v518, 23
  %v520 = vor.u32 4788187, %v519
  %v521 = vand.u32 2147483647, %v520
  %v523 = vcvt.s32.f32 %v516
  %v524 = vmul.f32 %v523, %v521
  %v525 = vxor.u32 %v524, 2147483648
  %v526 = vsel %vm443, %v525, %v524
  %v527 = vsub.s32 4, %v503
  %v528 = vsel %vm443, %v527, %v503
  %v529 = vsel %vm442, %v224, %v526
  %v530 = vsel %vm442, 0, %v528
  %v531 = vcosq.f32.pop %v529
  %v532 = vsinq.f32.pop %v529
  %vm533 = vweird.f32 %v224
  %v534 = vadd.s32 %v530, 3
  %v535 = vand.u32 %v534, 3
  %vm536 = vcmp.lt.s32.totalorder %v535, 2
  %vm537 = vcmp.eq.s32.totalorder %v535, 0
  %v538 = vxor.u32 %v532, 2147483648
  %v539 = vsel %vm537, %v531, %v538
  %vm540 = vcmp.eq.s32.totalorder %v535, 2
  %v541 = vxor.u32 %v531, 2147483648
  %v542 = vsel %vm540, %v541, %v532
  %v543 = vsel %vm536, %v539, %v542
  %v544 = vsel %vm533, nan, %v543
  %v545 = vand.u32 2147483647, %v226
  %vm546 = vcmp.le.f32.partialorder %v545, 0.7853982
  %vm547 = vcmp.lt.s32.totalorder %v226, 0
  %v548 = vand.u32 %v226, 2139095040
  %v549 = vshrl.u32 %v548, 23
  %v550 = vsub.s32 %v549, 127
  %v551 = vand.u32 2147483647, %v226
  %v552 = vand.u32 %v551, 8388607
  %v553 = vor.u32 %v552, 8388608
  %v554 = vsub.s32 0, %v553
  %v555 = vadd.s32 %v550, 1
  %vm556 = vcmp.gt.s32.totalorder %v555, 0
  %v557 = vsel %vm556, %v555, 0
  %v558 = vshrl.u32 %v557, 5
  %v559 = vand.u32 %v557, 31
  %v560 = vsub.s32 32, %v559
  %v561 = vshrl.u32 683565275, %v560
  %v562 = vshll.u32 683565275, %v559
  %v563 = vshrl.u32 2475754826, %v560
  %v564 = vor.u32 %v562, %v563
  %v565 = vshll.u32 2475754826, %v559
  %v566 = vshrl.u32 2131351028, %v560
  %v567 = vor.u32 %v565, %v566
  %v568 = vshll.u32 2131351028, %v559
  %v569 = vshrl.u32 2102212464, %v560
  %v570 = vor.u32 %v568, %v569
  %v571 = vshll.u32 2102212464, %v559
  %v572 = vshrl.u32 920167782, %v560
  %v573 = vor.u32 %v571, %v572
  %v574 = vshll.u32 920167782, %v559
  %v575 = vshrl.u32 1326507024, %v560
  %v576 = vor.u32 %v574, %v575
  %vm577 = vcmp.lt.s32.totalorder %v558, 1
  %vm578 = vcmp.lt.s32.totalorder %v558, 2
  %vm579 = vcmp.lt.s32.totalorder %v558, 3
  %vm580 = vcmp.lt.s32.totalorder %v558, 4
  %v581 = vsel %vm577, %v561, %v564
  %v582 = vsel %vm580, %v570, 2102212464
  %v583 = vsel %vm579, %v567, %v582
  %v584 = vsel %vm578, %v581, %v583
  %v585 = vsel %vm577, %v564, %v567
  %v586 = vsel %vm580, %v573, 920167782
  %v587 = vsel %vm579, %v570, %v586
  %v588 = vsel %vm578, %v585, %v587
  %v589 = vsel %vm577, %v567, %v570
  %v590 = vsel %vm580, %v576, 1326507024
  %v591 = vsel %vm579, %v573, %v590
  %v592 = vsel %vm578, %v589, %v591
  %v593 = vshll.u32 %v553, 8
  %v594 = vmul.u32.u64.compose %v593, %v592
  %v595 = vextract.low.u32 %v594
  %v596 = vextract.high.u32 %v594
  %v597 = vmul.u32.u64.compose %v593, %v588
  %v598 = vextract.low.u32 %v597
  %v599 = vextract.high.u32 %v597
  %v600 = vmul.u32 %v593, %v584
  %v601 = vadd.s32 %v596, %v598
  %vm602 = vc.u32 %v596, %v598
  %v603 = vadd.s32 %v599, 1
  %v604 = vsel %vm602, %v603, %v599
  %v605 = vadd.s32 %v600, %v604
  %v606 = vadd.s32 %v605, 536870912
  %v607 = vshrl.u32 %v606, 30
  %v608 = vshll.u32 %v607, 30
  %v609 = vsub.s32 %v605, %v608
  %vm610 = vcmp.lt.s32.totalorder %v609, 0
  %v611 = vsub.s32 0, %v609
  %v612 = vsel %vm610, %v611, %v609
  %v613 = vclz %v612
  %v614 = vsub.s32 %v613, 2
  %vm615 = vcmp.gt.s32.totalorder 0, %v614
  %v616 = vsel %vm615, 0, %v614
  %v617 = vsub.s32 32, %v616
  %v618 = vshll.u32 %v609, %v616
  %v619 = vshrl.u32 %v601, %v617
  %v620 = vor.u32 %v618, %v619
  %v621 = vsub.s32 4294967266, %v616
  %v622 = vadd.s32 %v621, 127
  %v623 = vshll.u32 %v622, 23
  %v624 = vor.u32 4788187, %v623
  %v625 = vand.u32 2147483647, %v624
  %v627 = vcvt.s32.f32 %v620
  %v628 = vmul.f32 %v627, %v625
  %v629 = vxor.u32 %v628, 2147483648
  %v630 = vsel %vm547, %v629, %v628
  %v631 = vsub.s32 4, %v607
  %v632 = vsel %vm547, %v631, %v607
  %v633 = vsel %vm546, %v226, %v630
  %v634 = vsel %vm546, 0, %v632
  %v635 = vcosq.f32.pop %v633
  %v636 = vsinq.f32.pop %v633
  %vm637 = vweird.f32 %v226
  %v638 = vadd.s32 %v634, 3
  %v639 = vand.u32 %v638, 3
  %vm640 = vcmp.lt.s32.totalorder %v639, 2
  %vm641 = vcmp.eq.s32.totalorder %v639, 0
  %v642 = vxor.u32 %v636, 2147483648
  %v643 = vsel %vm641, %v635, %v642
  %vm644 = vcmp.eq.s32.totalorder %v639, 2
  %v645 = vxor.u32 %v635, 2147483648
  %v646 = vsel %vm644, %v645, %v636
  %v647 = vsel %vm640, %v643, %v646
  %v648 = vsel %vm637, nan, %v647
  %v649 = vand.u32 2147483647, %v295
  %vm650 = vcmp.le.f32.partialorder %v649, 0.7853982
  %vm651 = vcmp.lt.s32.totalorder %v295, 0
  %v652 = vand.u32 %v295, 2139095040
  %v653 = vshrl.u32 %v652, 23
  %v654 = vsub.s32 %v653, 127
  %v655 = vand.u32 2147483647, %v295
  %v656 = vand.u32 %v655, 8388607
  %v657 = vor.u32 %v656, 8388608
  %v658 = vsub.s32 0, %v657
  %v659 = vadd.s32 %v654, 1
  %vm660 = vcmp.gt.s32.totalorder %v659, 0
  %v661 = vsel %vm660, %v659, 0
  %v662 = vshrl.u32 %v661, 5
  %v663 = vand.u32 %v661, 31
  %v664 = vsub.s32 32, %v663
  %v665 = vshrl.u32 683565275, %v664
  %v666 = vshll.u32 683565275, %v663
  %v667 = vshrl.u32 2475754826, %v664
  %v668 = vor.u32 %v666, %v667
  %v669 = vshll.u32 2475754826, %v663
  %v670 = vshrl.u32 2131351028, %v664
  %v671 = vor.u32 %v669, %v670
  %v672 = vshll.u32 2131351028, %v663
  %v673 = vshrl.u32 2102212464, %v664
  %v674 = vor.u32 %v672, %v673
  %v675 = vshll.u32 2102212464, %v663
  %v676 = vshrl.u32 920167782, %v664
  %v677 = vor.u32 %v675, %v676
  %v678 = vshll.u32 920167782, %v663
  %v679 = vshrl.u32 1326507024, %v664
  %v680 = vor.u32 %v678, %v679
  %vm681 = vcmp.lt.s32.totalorder %v662, 1
  %vm682 = vcmp.lt.s32.totalorder %v662, 2
  %vm683 = vcmp.lt.s32.totalorder %v662, 3
  %vm684 = vcmp.lt.s32.totalorder %v662, 4
  %v685 = vsel %vm681, %v665, %v668
  %v686 = vsel %vm684, %v674, 2102212464
  %v687 = vsel %vm683, %v671, %v686
  %v688 = vsel %vm682, %v685, %v687
  %v689 = vsel %vm681, %v668, %v671
  %v690 = vsel %vm684, %v677, 920167782
  %v691 = vsel %vm683, %v674, %v690
  %v692 = vsel %vm682, %v689, %v691
  %v693 = vsel %vm681, %v671, %v674
  %v694 = vsel %vm684, %v680, 1326507024
  %v695 = vsel %vm683, %v677, %v694
  %v696 = vsel %vm682, %v693, %v695
  %v697 = vshll.u32 %v657, 8
  %v698 = vmul.u32.u64.compose %v697, %v696
  %v699 = vextract.low.u32 %v698
  %v700 = vextract.high.u32 %v698
  %v701 = vmul.u32.u64.compose %v697, %v692
  %v702 = vextract.low.u32 %v701
  %v703 = vextract.high.u32 %v701
  %v704 = vmul.u32 %v697, %v688
  %v705 = vadd.s32 %v700, %v702
  %vm706 = vc.u32 %v700, %v702
  %v707 = vadd.s32 %v703, 1
  %v708 = vsel %vm706, %v707, %v703
  %v709 = vadd.s32 %v704, %v708
  %v710 = vadd.s32 %v709, 536870912
  %v711 = vshrl.u32 %v710, 30
  %v712 = vshll.u32 %v711, 30
  %v713 = vsub.s32 %v709, %v712
  %vm714 = vcmp.lt.s32.totalorder %v713, 0
  %v715 = vsub.s32 0, %v713
  %v716 = vsel %vm714, %v715, %v713
  %v717 = vclz %v716
  %v718 = vsub.s32 %v717, 2
  %vm719 = vcmp.gt.s32.totalorder 0, %v718
  %v720 = vsel %vm719, 0, %v718
  %v721 = vsub.s32 32, %v720
  %v722 = vshll.u32 %v713, %v720
  %v723 = vshrl.u32 %v705, %v721
  %v724 = vor.u32 %v722, %v723
  %v725 = vsub.s32 4294967266, %v720
  %v726 = vadd.s32 %v725, 127
  %v727 = vshll.u32 %v726, 23
  %v728 = vor.u32 4788187, %v727
  %v729 = vand.u32 2147483647, %v728
  %v731 = vcvt.s32.f32 %v724
  %v732 = vmul.f32 %v731, %v729
  %v733 = vxor.u32 %v732, 2147483648
  %v734 = vsel %vm651, %v733, %v732
  %v735 = vsub.s32 4, %v711
  %v736 = vsel %vm651, %v735, %v711
  %v737 = vsel %vm650, %v295, %v734
  %v738 = vsel %vm650, 0, %v736
  %v739 = vcosq.f32.pop %v737
  %v740 = vsinq.f32.pop %v737
  %vm741 = vweird.f32 %v295
  %v742 = vadd.s32 %v738, 3
  %v743 = vand.u32 %v742, 3
  %vm744 = vcmp.lt.s32.totalorder %v743, 2
  %vm745 = vcmp.eq.s32.totalorder %v743, 0
  %v746 = vxor.u32 %v740, 2147483648
  %v747 = vsel %vm745, %v739, %v746
  %vm748 = vcmp.eq.s32.totalorder %v743, 2
  %v749 = vxor.u32 %v739, 2147483648
  %v750 = vsel %vm748, %v749, %v740
  %v751 = vsel %vm744, %v747, %v750
  %v752 = vsel %vm741, nan, %v751
  %v753 = vand.u32 2147483647, %v297
  %vm754 = vcmp.le.f32.partialorder %v753, 0.7853982
  %vm755 = vcmp.lt.s32.totalorder %v297, 0
  %v756 = vand.u32 %v297, 2139095040
  %v757 = vshrl.u32 %v756, 23
  %v758 = vsub.s32 %v757, 127
  %v759 = vand.u32 2147483647, %v297
  %v760 = vand.u32 %v759, 8388607
  %v761 = vor.u32 %v760, 8388608
  %v762 = vsub.s32 0, %v761
  %v763 = vadd.s32 %v758, 1
  %vm764 = vcmp.gt.s32.totalorder %v763, 0
  %v765 = vsel %vm764, %v763, 0
  %v766 = vshrl.u32 %v765, 5
  %v767 = vand.u32 %v765, 31
  %v768 = vsub.s32 32, %v767
  %v769 = vshrl.u32 683565275, %v768
  %v770 = vshll.u32 683565275, %v767
  %v771 = vshrl.u32 2475754826, %v768
  %v772 = vor.u32 %v770, %v771
  %v773 = vshll.u32 2475754826, %v767
  %v774 = vshrl.u32 2131351028, %v768
  %v775 = vor.u32 %v773, %v774
  %v776 = vshll.u32 2131351028, %v767
  %v777 = vshrl.u32 2102212464, %v768
  %v778 = vor.u32 %v776, %v777
  %v779 = vshll.u32 2102212464, %v767
  %v780 = vshrl.u32 920167782, %v768
  %v781 = vor.u32 %v779, %v780
  %v782 = vshll.u32 920167782, %v767
  %v783 = vshrl.u32 1326507024, %v768
  %v784 = vor.u32 %v782, %v783
  %vm785 = vcmp.lt.s32.totalorder %v766, 1
  %vm786 = vcmp.lt.s32.totalorder %v766, 2
  %vm787 = vcmp.lt.s32.totalorder %v766, 3
  %vm788 = vcmp.lt.s32.totalorder %v766, 4
  %v789 = vsel %vm785, %v769, %v772
  %v790 = vsel %vm788, %v778, 2102212464
  %v791 = vsel %vm787, %v775, %v790
  %v792 = vsel %vm786, %v789, %v791
  %v793 = vsel %vm785, %v772, %v775
  %v794 = vsel %vm788, %v781, 920167782
  %v795 = vsel %vm787, %v778, %v794
  %v796 = vsel %vm786, %v793, %v795
  %v797 = vsel %vm785, %v775, %v778
  %v798 = vsel %vm788, %v784, 1326507024
  %v799 = vsel %vm787, %v781, %v798
  %v800 = vsel %vm786, %v797, %v799
  %v801 = vshll.u32 %v761, 8
  %v802 = vmul.u32.u64.compose %v801, %v800
  %v803 = vextract.low.u32 %v802
  %v804 = vextract.high.u32 %v802
  %v805 = vmul.u32.u64.compose %v801, %v796
  %v806 = vextract.low.u32 %v805
  %v807 = vextract.high.u32 %v805
  %v808 = vmul.u32 %v801, %v792
  %v809 = vadd.s32 %v804, %v806
  %vm810 = vc.u32 %v804, %v806
  %v811 = vadd.s32 %v807, 1
  %v812 = vsel %vm810, %v811, %v807
  %v813 = vadd.s32 %v808, %v812
  %v814 = vadd.s32 %v813, 536870912
  %v815 = vshrl.u32 %v814, 30
  %v816 = vshll.u32 %v815, 30
  %v817 = vsub.s32 %v813, %v816
  %vm818 = vcmp.lt.s32.totalorder %v817, 0
  %v819 = vsub.s32 0, %v817
  %v820 = vsel %vm818, %v819, %v817
  %v821 = vclz %v820
  %v822 = vsub.s32 %v821, 2
  %vm823 = vcmp.gt.s32.totalorder 0, %v822
  %v824 = vsel %vm823, 0, %v822
  %v825 = vsub.s32 32, %v824
  %v826 = vshll.u32 %v817, %v824
  %v827 = vshrl.u32 %v809, %v825
  %v828 = vor.u32 %v826, %v827
  %v829 = vsub.s32 4294967266, %v824
  %v830 = vadd.s32 %v829, 127
  %v831 = vshll.u32 %v830, 23
  %v832 = vor.u32 4788187, %v831
  %v833 = vand.u32 2147483647, %v832
  %v835 = vcvt.s32.f32 %v828
  %v836 = vmul.f32 %v835, %v833
  %v837 = vxor.u32 %v836, 2147483648
  %v838 = vsel %vm755, %v837, %v836
  %v839 = vsub.s32 4, %v815
  %v840 = vsel %vm755, %v839, %v815
  %v841 = vsel %vm754, %v297, %v838
  %v842 = vsel %vm754, 0, %v840
  %v843 = vcosq.f32.pop %v841
  %v844 = vsinq.f32.pop %v841
  %vm845 = vweird.f32 %v297
  %v846 = vadd.s32 %v842, 3
  %v847 = vand.u32 %v846, 3
  %vm848 = vcmp.lt.s32.totalorder %v847, 2
  %vm849 = vcmp.eq.s32.totalorder %v847, 0
  %v850 = vxor.u32 %v844, 2147483648
  %v851 = vsel %vm849, %v843, %v850
  %vm852 = vcmp.eq.s32.totalorder %v847, 2
  %v853 = vxor.u32 %v843, 2147483648
  %v854 = vsel %vm852, %v853, %v844
  %v855 = vsel %vm848, %v851, %v854
  %v856 = vsel %vm845, nan, %v855
  %v857 = vand.u32 2147483647, %v366
  %vm858 = vcmp.le.f32.partialorder %v857, 0.7853982
  %vm859 = vcmp.lt.s32.totalorder %v366, 0
  %v860 = vand.u32 %v366, 2139095040
  %v861 = vshrl.u32 %v860, 23
  %v862 = vsub.s32 %v861, 127
  %v863 = vand.u32 2147483647, %v366
  %v864 = vand.u32 %v863, 8388607
  %v865 = vor.u32 %v864, 8388608
  %v866 = vsub.s32 0, %v865
  %v867 = vadd.s32 %v862, 1
  %vm868 = vcmp.gt.s32.totalorder %v867, 0
  %v869 = vsel %vm868, %v867, 0
  %v870 = vshrl.u32 %v869, 5
  %v871 = vand.u32 %v869, 31
  %v872 = vsub.s32 32, %v871
  %v873 = vshrl.u32 683565275, %v872
  %v874 = vshll.u32 683565275, %v871
  %v875 = vshrl.u32 2475754826, %v872
  %v876 = vor.u32 %v874, %v875
  %v877 = vshll.u32 2475754826, %v871
  %v878 = vshrl.u32 2131351028, %v872
  %v879 = vor.u32 %v877, %v878
  %v880 = vshll.u32 2131351028, %v871
  %v881 = vshrl.u32 2102212464, %v872
  %v882 = vor.u32 %v880, %v881
  %v883 = vshll.u32 2102212464, %v871
  %v884 = vshrl.u32 920167782, %v872
  %v885 = vor.u32 %v883, %v884
  %v886 = vshll.u32 920167782, %v871
  %v887 = vshrl.u32 1326507024, %v872
  %v888 = vor.u32 %v886, %v887
  %vm889 = vcmp.lt.s32.totalorder %v870, 1
  %vm890 = vcmp.lt.s32.totalorder %v870, 2
  %vm891 = vcmp.lt.s32.totalorder %v870, 3
  %vm892 = vcmp.lt.s32.totalorder %v870, 4
  %v893 = vsel %vm889, %v873, %v876
  %v894 = vsel %vm892, %v882, 2102212464
  %v895 = vsel %vm891, %v879, %v894
  %v896 = vsel %vm890, %v893, %v895
  %v897 = vsel %vm889, %v876, %v879
  %v898 = vsel %vm892, %v885, 920167782
  %v899 = vsel %vm891, %v882, %v898
  %v900 = vsel %vm890, %v897, %v899
  %v901 = vsel %vm889, %v879, %v882
  %v902 = vsel %vm892, %v888, 1326507024
  %v903 = vsel %vm891, %v885, %v902
  %v904 = vsel %vm890, %v901, %v903
  %v905 = vshll.u32 %v865, 8
  %v906 = vmul.u32.u64.compose %v905, %v904
  %v907 = vextract.low.u32 %v906
  %v908 = vextract.high.u32 %v906
  %v909 = vmul.u32.u64.compose %v905, %v900
  %v910 = vextract.low.u32 %v909
  %v911 = vextract.high.u32 %v909
  %v912 = vmul.u32 %v905, %v896
  %v913 = vadd.s32 %v908, %v910
  %vm914 = vc.u32 %v908, %v910
  %v915 = vadd.s32 %v911, 1
  %v916 = vsel %vm914, %v915, %v911
  %v917 = vadd.s32 %v912, %v916
  %v918 = vadd.s32 %v917, 536870912
  %v919 = vshrl.u32 %v918, 30
  %v920 = vshll.u32 %v919, 30
  %v921 = vsub.s32 %v917, %v920
  %vm922 = vcmp.lt.s32.totalorder %v921, 0
  %v923 = vsub.s32 0, %v921
  %v924 = vsel %vm922, %v923, %v921
  %v925 = vclz %v924
  %v926 = vsub.s32 %v925, 2
  %vm927 = vcmp.gt.s32.totalorder 0, %v926
  %v928 = vsel %vm927, 0, %v926
  %v929 = vsub.s32 32, %v928
  %v930 = vshll.u32 %v921, %v928
  %v931 = vshrl.u32 %v913, %v929
  %v932 = vor.u32 %v930, %v931
  %v933 = vsub.s32 4294967266, %v928
  %v934 = vadd.s32 %v933, 127
  %v935 = vshll.u32 %v934, 23
  %v936 = vor.u32 4788187, %v935
  %v937 = vand.u32 2147483647, %v936
  %v939 = vcvt.s32.f32 %v932
  %v940 = vmul.f32 %v939, %v937
  %v941 = vxor.u32 %v940, 2147483648
  %v942 = vsel %vm859, %v941, %v940
  %v943 = vsub.s32 4, %v919
  %v944 = vsel %vm859, %v943, %v919
  %v945 = vsel %vm858, %v366, %v942
  %v946 = vsel %vm858, 0, %v944
  %v947 = vcosq.f32.pop %v945
  %v948 = vsinq.f32.pop %v945
  %vm949 = vweird.f32 %v366
  %v950 = vadd.s32 %v946, 3
  %v951 = vand.u32 %v950, 3
  %vm952 = vcmp.lt.s32.totalorder %v951, 2
  %vm953 = vcmp.eq.s32.totalorder %v951, 0
  %v954 = vxor.u32 %v948, 2147483648
  %v955 = vsel %vm953, %v947, %v954
  %vm956 = vcmp.eq.s32.totalorder %v951, 2
  %v957 = vxor.u32 %v947, 2147483648
  %v958 = vsel %vm956, %v957, %v948
  %v959 = vsel %vm952, %v955, %v958
  %v960 = vsel %vm949, nan, %v959
  %v961 = vand.u32 2147483647, %v368
  %vm962 = vcmp.le.f32.partialorder %v961, 0.7853982
  %vm963 = vcmp.lt.s32.totalorder %v368, 0
  %v964 = vand.u32 %v368, 2139095040
  %v965 = vshrl.u32 %v964, 23
  %v966 = vsub.s32 %v965, 127
  %v967 = vand.u32 2147483647, %v368
  %v968 = vand.u32 %v967, 8388607
  %v969 = vor.u32 %v968, 8388608
  %v970 = vsub.s32 0, %v969
  %v971 = vadd.s32 %v966, 1
  %vm972 = vcmp.gt.s32.totalorder %v971, 0
  %v973 = vsel %vm972, %v971, 0
  %v974 = vshrl.u32 %v973, 5
  %v975 = vand.u32 %v973, 31
  %v976 = vsub.s32 32, %v975
  %v977 = vshrl.u32 683565275, %v976
  %v978 = vshll.u32 683565275, %v975
  %v979 = vshrl.u32 2475754826, %v976
  %v980 = vor.u32 %v978, %v979
  %v981 = vshll.u32 2475754826, %v975
  %v982 = vshrl.u32 2131351028, %v976
  %v983 = vor.u32 %v981, %v982
  %v984 = vshll.u32 2131351028, %v975
  %v985 = vshrl.u32 2102212464, %v976
  %v986 = vor.u32 %v984, %v985
  %v987 = vshll.u32 2102212464, %v975
  %v988 = vshrl.u32 920167782, %v976
  %v989 = vor.u32 %v987, %v988
  %v990 = vshll.u32 920167782, %v975
  %v991 = vshrl.u32 1326507024, %v976
  %v992 = vor.u32 %v990, %v991
  %vm993 = vcmp.lt.s32.totalorder %v974, 1
  %vm994 = vcmp.lt.s32.totalorder %v974, 2
  %vm995 = vcmp.lt.s32.totalorder %v974, 3
  %vm996 = vcmp.lt.s32.totalorder %v974, 4
  %v997 = vsel %vm993, %v977, %v980
  %v998 = vsel %vm996, %v986, 2102212464
  %v999 = vsel %vm995, %v983, %v998
  %v1000 = vsel %vm994, %v997, %v999
  %v1001 = vsel %vm993, %v980, %v983
  %v1002 = vsel %vm996, %v989, 920167782
  %v1003 = vsel %vm995, %v986, %v1002
  %v1004 = vsel %vm994, %v1001, %v1003
  %v1005 = vsel %vm993, %v983, %v986
  %v1006 = vsel %vm996, %v992, 1326507024
  %v1007 = vsel %vm995, %v989, %v1006
  %v1008 = vsel %vm994, %v1005, %v1007
  %v1009 = vshll.u32 %v969, 8
  %v1010 = vmul.u32.u64.compose %v1009, %v1008
  %v1011 = vextract.low.u32 %v1010
  %v1012 = vextract.high.u32 %v1010
  %v1013 = vmul.u32.u64.compose %v1009, %v1004
  %v1014 = vextract.low.u32 %v1013
  %v1015 = vextract.high.u32 %v1013
  %v1016 = vmul.u32 %v1009, %v1000
  %v1017 = vadd.s32 %v1012, %v1014
  %vm1018 = vc.u32 %v1012, %v1014
  %v1019 = vadd.s32 %v1015, 1
  %v1020 = vsel %vm1018, %v1019, %v1015
  %v1021 = vadd.s32 %v1016, %v1020
  %v1022 = vadd.s32 %v1021, 536870912
  %v1023 = vshrl.u32 %v1022, 30
  %v1024 = vshll.u32 %v1023, 30
  %v1025 = vsub.s32 %v1021, %v1024
  %vm1026 = vcmp.lt.s32.totalorder %v1025, 0
  %v1027 = vsub.s32 0, %v1025
  %v1028 = vsel %vm1026, %v1027, %v1025
  %v1029 = vclz %v1028
  %v1030 = vsub.s32 %v1029, 2
  %vm1031 = vcmp.gt.s32.totalorder 0, %v1030
  %v1032 = vsel %vm1031, 0, %v1030
  %v1033 = vsub.s32 32, %v1032
  %v1034 = vshll.u32 %v1025, %v1032
  %v1035 = vshrl.u32 %v1017, %v1033
  %v1036 = vor.u32 %v1034, %v1035
  %v1037 = vsub.s32 4294967266, %v1032
  %v1038 = vadd.s32 %v1037, 127
  %v1039 = vshll.u32 %v1038, 23
  %v1040 = vor.u32 4788187, %v1039
  %v1041 = vand.u32 2147483647, %v1040
  %v1043 = vcvt.s32.f32 %v1036
  %v1044 = vmul.f32 %v1043, %v1041
  %v1045 = vxor.u32 %v1044, 2147483648
  %v1046 = vsel %vm963, %v1045, %v1044
  %v1047 = vsub.s32 4, %v1023
  %v1048 = vsel %vm963, %v1047, %v1023
  %v1049 = vsel %vm962, %v368, %v1046
  %v1050 = vsel %vm962, 0, %v1048
  %v1051 = vcosq.f32.pop %v1049
  %v1052 = vsinq.f32.pop %v1049
  %vm1053 = vweird.f32 %v368
  %v1054 = vadd.s32 %v1050, 3
  %v1055 = vand.u32 %v1054, 3
  %vm1056 = vcmp.lt.s32.totalorder %v1055, 2
  %vm1057 = vcmp.eq.s32.totalorder %v1055, 0
  %v1058 = vxor.u32 %v1052, 2147483648
  %v1059 = vsel %vm1057, %v1051, %v1058
  %vm1060 = vcmp.eq.s32.totalorder %v1055, 2
  %v1061 = vxor.u32 %v1051, 2147483648
  %v1062 = vsel %vm1060, %v1061, %v1052
  %v1063 = vsel %vm1056, %v1059, %v1062
  %v1064 = vsel %vm1053, nan, %v1063
  %v1065 = vand.u32 2147483647, %v437
  %vm1066 = vcmp.le.f32.partialorder %v1065, 0.7853982
  %vm1067 = vcmp.lt.s32.totalorder %v437, 0
  %v1068 = vand.u32 %v437, 2139095040
  %v1069 = vshrl.u32 %v1068, 23
  %v1070 = vsub.s32 %v1069, 127
  %v1071 = vand.u32 2147483647, %v437
  %v1072 = vand.u32 %v1071, 8388607
  %v1073 = vor.u32 %v1072, 8388608
  %v1074 = vsub.s32 0, %v1073
  %v1075 = vadd.s32 %v1070, 1
  %vm1076 = vcmp.gt.s32.totalorder %v1075, 0
  %v1077 = vsel %vm1076, %v1075, 0
  %v1078 = vshrl.u32 %v1077, 5
  %v1079 = vand.u32 %v1077, 31
  %v1080 = vsub.s32 32, %v1079
  %v1081 = vshrl.u32 683565275, %v1080
  %v1082 = vshll.u32 683565275, %v1079
  %v1083 = vshrl.u32 2475754826, %v1080
  %v1084 = vor.u32 %v1082, %v1083
  %v1085 = vshll.u32 2475754826, %v1079
  %v1086 = vshrl.u32 2131351028, %v1080
  %v1087 = vor.u32 %v1085, %v1086
  %v1088 = vshll.u32 2131351028, %v1079
  %v1089 = vshrl.u32 2102212464, %v1080
  %v1090 = vor.u32 %v1088, %v1089
  %v1091 = vshll.u32 2102212464, %v1079
  %v1092 = vshrl.u32 920167782, %v1080
  %v1093 = vor.u32 %v1091, %v1092
  %v1094 = vshll.u32 920167782, %v1079
  %v1095 = vshrl.u32 1326507024, %v1080
  %v1096 = vor.u32 %v1094, %v1095
  %vm1097 = vcmp.lt.s32.totalorder %v1078, 1
  %vm1098 = vcmp.lt.s32.totalorder %v1078, 2
  %vm1099 = vcmp.lt.s32.totalorder %v1078, 3
  %vm1100 = vcmp.lt.s32.totalorder %v1078, 4
  %v1101 = vsel %vm1097, %v1081, %v1084
  %v1102 = vsel %vm1100, %v1090, 2102212464
  %v1103 = vsel %vm1099, %v1087, %v1102
  %v1104 = vsel %vm1098, %v1101, %v1103
  %v1105 = vsel %vm1097, %v1084, %v1087
  %v1106 = vsel %vm1100, %v1093, 920167782
  %v1107 = vsel %vm1099, %v1090, %v1106
  %v1108 = vsel %vm1098, %v1105, %v1107
  %v1109 = vsel %vm1097, %v1087, %v1090
  %v1110 = vsel %vm1100, %v1096, 1326507024
  %v1111 = vsel %vm1099, %v1093, %v1110
  %v1112 = vsel %vm1098, %v1109, %v1111
  %v1113 = vshll.u32 %v1073, 8
  %v1114 = vmul.u32.u64.compose %v1113, %v1112
  %v1115 = vextract.low.u32 %v1114
  %v1116 = vextract.high.u32 %v1114
  %v1117 = vmul.u32.u64.compose %v1113, %v1108
  %v1118 = vextract.low.u32 %v1117
  %v1119 = vextract.high.u32 %v1117
  %v1120 = vmul.u32 %v1113, %v1104
  %v1121 = vadd.s32 %v1116, %v1118
  %vm1122 = vc.u32 %v1116, %v1118
  %v1123 = vadd.s32 %v1119, 1
  %v1124 = vsel %vm1122, %v1123, %v1119
  %v1125 = vadd.s32 %v1120, %v1124
  %v1126 = vadd.s32 %v1125, 536870912
  %v1127 = vshrl.u32 %v1126, 30
  %v1128 = vshll.u32 %v1127, 30
  %v1129 = vsub.s32 %v1125, %v1128
  %vm1130 = vcmp.lt.s32.totalorder %v1129, 0
  %v1131 = vsub.s32 0, %v1129
  %v1132 = vsel %vm1130, %v1131, %v1129
  %v1133 = vclz %v1132
  %v1134 = vsub.s32 %v1133, 2
  %vm1135 = vcmp.gt.s32.totalorder 0, %v1134
  %v1136 = vsel %vm1135, 0, %v1134
  %v1137 = vsub.s32 32, %v1136
  %v1138 = vshll.u32 %v1129, %v1136
  %v1139 = vshrl.u32 %v1121, %v1137
  %v1140 = vor.u32 %v1138, %v1139
  %v1141 = vsub.s32 4294967266, %v1136
  %v1142 = vadd.s32 %v1141, 127
  %v1143 = vshll.u32 %v1142, 23
  %v1144 = vor.u32 4788187, %v1143
  %v1145 = vand.u32 2147483647, %v1144
  %v1147 = vcvt.s32.f32 %v1140
  %v1148 = vmul.f32 %v1147, %v1145
  %v1149 = vxor.u32 %v1148, 2147483648
  %v1150 = vsel %vm1067, %v1149, %v1148
  %v1151 = vsub.s32 4, %v1127
  %v1152 = vsel %vm1067, %v1151, %v1127
  %v1153 = vsel %vm1066, %v437, %v1150
  %v1154 = vsel %vm1066, 0, %v1152
  %v1155 = vcosq.f32.pop %v1153
  %v1156 = vsinq.f32.pop %v1153
  %vm1157 = vweird.f32 %v437
  %v1158 = vadd.s32 %v1154, 3
  %v1159 = vand.u32 %v1158, 3
  %vm1160 = vcmp.lt.s32.totalorder %v1159, 2
  %vm1161 = vcmp.eq.s32.totalorder %v1159, 0
  %v1162 = vxor.u32 %v1156, 2147483648
  %v1163 = vsel %vm1161, %v1155, %v1162
  %vm1164 = vcmp.eq.s32.totalorder %v1159, 2
  %v1165 = vxor.u32 %v1155, 2147483648
  %v1166 = vsel %vm1164, %v1165, %v1156
  %v1167 = vsel %vm1160, %v1163, %v1166
  %v1168 = vsel %vm1157, nan, %v1167
  %v1169 = vand.u32 2147483647, %v439
  %vm1170 = vcmp.le.f32.partialorder %v1169, 0.7853982
  %vm1171 = vcmp.lt.s32.totalorder %v439, 0
  %v1172 = vand.u32 %v439, 2139095040
  %v1173 = vshrl.u32 %v1172, 23
  %v1174 = vsub.s32 %v1173, 127
  %v1175 = vand.u32 2147483647, %v439
  %v1176 = vand.u32 %v1175, 8388607
  %v1177 = vor.u32 %v1176, 8388608
  %v1178 = vsub.s32 0, %v1177
  %v1179 = vadd.s32 %v1174, 1
  %vm1180 = vcmp.gt.s32.totalorder %v1179, 0
  %v1181 = vsel %vm1180, %v1179, 0
  %v1182 = vshrl.u32 %v1181, 5
  %v1183 = vand.u32 %v1181, 31
  %v1184 = vsub.s32 32, %v1183
  %v1185 = vshrl.u32 683565275, %v1184
  %v1186 = vshll.u32 683565275, %v1183
  %v1187 = vshrl.u32 2475754826, %v1184
  %v1188 = vor.u32 %v1186, %v1187
  %v1189 = vshll.u32 2475754826, %v1183
  %v1190 = vshrl.u32 2131351028, %v1184
  %v1191 = vor.u32 %v1189, %v1190
  %v1192 = vshll.u32 2131351028, %v1183
  %v1193 = vshrl.u32 2102212464, %v1184
  %v1194 = vor.u32 %v1192, %v1193
  %v1195 = vshll.u32 2102212464, %v1183
  %v1196 = vshrl.u32 920167782, %v1184
  %v1197 = vor.u32 %v1195, %v1196
  %v1198 = vshll.u32 920167782, %v1183
  %v1199 = vshrl.u32 1326507024, %v1184
  %v1200 = vor.u32 %v1198, %v1199
  %vm1201 = vcmp.lt.s32.totalorder %v1182, 1
  %vm1202 = vcmp.lt.s32.totalorder %v1182, 2
  %vm1203 = vcmp.lt.s32.totalorder %v1182, 3
  %vm1204 = vcmp.lt.s32.totalorder %v1182, 4
  %v1205 = vsel %vm1201, %v1185, %v1188
  %v1206 = vsel %vm1204, %v1194, 2102212464
  %v1207 = vsel %vm1203, %v1191, %v1206
  %v1208 = vsel %vm1202, %v1205, %v1207
  %v1209 = vsel %vm1201, %v1188, %v1191
  %v1210 = vsel %vm1204, %v1197, 920167782
  %v1211 = vsel %vm1203, %v1194, %v1210
  %v1212 = vsel %vm1202, %v1209, %v1211
  %v1213 = vsel %vm1201, %v1191, %v1194
  %v1214 = vsel %vm1204, %v1200, 1326507024
  %v1215 = vsel %vm1203, %v1197, %v1214
  %v1216 = vsel %vm1202, %v1213, %v1215
  %v1217 = vshll.u32 %v1177, 8
  %v1218 = vmul.u32.u64.compose %v1217, %v1216
  %v1219 = vextract.low.u32 %v1218
  %v1220 = vextract.high.u32 %v1218
  %v1221 = vmul.u32.u64.compose %v1217, %v1212
  %v1222 = vextract.low.u32 %v1221
  %v1223 = vextract.high.u32 %v1221
  %v1224 = vmul.u32 %v1217, %v1208
  %v1225 = vadd.s32 %v1220, %v1222
  %vm1226 = vc.u32 %v1220, %v1222
  %v1227 = vadd.s32 %v1223, 1
  %v1228 = vsel %vm1226, %v1227, %v1223
  %v1229 = vadd.s32 %v1224, %v1228
  %v1230 = vadd.s32 %v1229, 536870912
  %v1231 = vshrl.u32 %v1230, 30
  %v1232 = vshll.u32 %v1231, 30
  %v1233 = vsub.s32 %v1229, %v1232
  %vm1234 = vcmp.lt.s32.totalorder %v1233, 0
  %v1235 = vsub.s32 0, %v1233
  %v1236 = vsel %vm1234, %v1235, %v1233
  %v1237 = vclz %v1236
  %v1238 = vsub.s32 %v1237, 2
  %vm1239 = vcmp.gt.s32.totalorder 0, %v1238
  %v1240 = vsel %vm1239, 0, %v1238
  %v1241 = vsub.s32 32, %v1240
  %v1242 = vshll.u32 %v1233, %v1240
  %v1243 = vshrl.u32 %v1225, %v1241
  %v1244 = vor.u32 %v1242, %v1243
  %v1245 = vsub.s32 4294967266, %v1240
  %v1246 = vadd.s32 %v1245, 127
  %v1247 = vshll.u32 %v1246, 23
  %v1248 = vor.u32 4788187, %v1247
  %v1249 = vand.u32 2147483647, %v1248
  %v1251 = vcvt.s32.f32 %v1244
  %v1252 = vmul.f32 %v1251, %v1249
  %v1253 = vxor.u32 %v1252, 2147483648
  %v1254 = vsel %vm1171, %v1253, %v1252
  %v1255 = vsub.s32 4, %v1231
  %v1256 = vsel %vm1171, %v1255, %v1231
  %v1257 = vsel %vm1170, %v439, %v1254
  %v1258 = vsel %vm1170, 0, %v1256
  %v1259 = vcosq.f32.pop %v1257
  %v1260 = vsinq.f32.pop %v1257
  %vm1261 = vweird.f32 %v439
  %v1262 = vadd.s32 %v1258, 3
  %v1263 = vand.u32 %v1262, 3
  %vm1264 = vcmp.lt.s32.totalorder %v1263, 2
  %vm1265 = vcmp.eq.s32.totalorder %v1263, 0
  %v1266 = vxor.u32 %v1260, 2147483648
  %v1267 = vsel %vm1265, %v1259, %v1266
  %vm1268 = vcmp.eq.s32.totalorder %v1263, 2
  %v1269 = vxor.u32 %v1259, 2147483648
  %v1270 = vsel %vm1268, %v1269, %v1260
  %v1271 = vsel %vm1264, %v1267, %v1270
  %v1272 = vsel %vm1261, nan, %v1271
  %1273 = vst [vmem:[%s3] sm:$0xff] %v544
  %1274 = vst [vmem:[%s3 + $0x8] sm:$0xff] %v648
  %1275 = vst [vmem:[%s3 + $0x10] sm:$0xff] %v752
  %1276 = vst [vmem:[%s3 + $0x18] sm:$0xff] %v856
  %1277 = vst [vmem:[%s3 + $0x20] sm:$0xff] %v960
  %1278 = vst [vmem:[%s3 + $0x28] sm:$0xff] %v1064
  %1279 = vst [vmem:[%s3 + $0x30] sm:$0xff] %v1168
  %1280 = vst [vmem:[%s3 + $0x38] sm:$0xff] %v1272
  // Predicated region
  $region14: #{fourier_pe.1} parent=0 // pred_check
    _
  $region15: #{fourier_pe.1} parent=0 // pred_check_branch
    %1282 = sbr.rel (0) target = $region17
  $region16: #{fourier_pe.1} parent=0 // pred_region
    _
  $region17: #{fourier_pe.1} parent=0 // pred_fallthru
    _
  // Predicated region
  $region18: #{fourier_pe.1} parent=0 // pred_check
    _
  $region19: #{fourier_pe.1} parent=0 // pred_check_branch
    %1284 = sbr.rel (0) target = $region21
  $region20: #{fourier_pe.1} parent=0 // pred_region
    _
  $region21: #{fourier_pe.1} parent=0 // pred_fallthru
    _

</llo_original>
